<compile_context>
chip_gen: v7x
topology: tpu7x:2x2x1
jax: 0.10.0
libtpu: 0.0.40
codegen_flags: <defaults>
</compile_context>

<pallas_src>
import functools

import jax
import jax.numpy as jnp
from jax.experimental import pallas as pl
from jax.experimental.pallas import tpu as pltpu


def _round_up(x, m):
    return ((x + m - 1) // m) * m


@functools.lru_cache(maxsize=None)
def _vmem_capacity_bytes():
    """Physical VMEM of the local TPU generation (fallback: 128 MiB)."""
    try:
        cap = int(getattr(pltpu.get_tpu_info(), "vmem_capacity_bytes", 0))
        if cap > 0:
            return cap
    except Exception:
        pass
    return 128 << 20


# ----------------------------------------------------------------------------
# Variant A: single pallas_call, logits cached in VMEM (one matmul pass).
#   grid = (num_m, 2 * num_n); j < num_n: matmul + online max/sum-exp + stash,
#   j >= num_n: read cached tile, subtract lse, store.  Weight/bias index maps
#   are pinned during pass 2 so the weight stream is read exactly once.
# ----------------------------------------------------------------------------
def _proj_logsoftmax_cached_kernel(x_ref, w_ref, b_ref, o_ref,
                                   m_scr, l_scr, cache_scr,
                                   *, num_n, tn, vocab, ragged_v):
    j = pl.program_id(1)

    @pl.when(j == 0)
    def _():
        m_scr[...] = jnp.full_like(m_scr, -jnp.inf)
        l_scr[...] = jnp.zeros_like(l_scr)

    @pl.when(j < num_n)  # pass 1: matmul, stash logits, online max / sum-exp
    def _():
        logits = jnp.dot(x_ref[...], w_ref[...],
                         preferred_element_type=jnp.float32)
        logits = logits + b_ref[...].astype(jnp.float32)
        if ragged_v:
            col = j * tn + jax.lax.broadcasted_iota(jnp.int32, logits.shape, 1)
            logits = jnp.where(col < vocab, logits, -jnp.inf)
        cache_scr[j] = logits
        m_prev = m_scr[...]
        m_new = jnp.maximum(m_prev, jnp.max(logits, axis=-1, keepdims=True))
        l_scr[...] = (l_scr[...] * jnp.exp(m_prev - m_new)
                      + jnp.sum(jnp.exp(logits - m_new), axis=-1, keepdims=True))
        m_scr[...] = m_new

    @pl.when(j == num_n)  # fold lse = m + log(l) once per row tile
    def _():
        m_scr[...] = m_scr[...] + jnp.log(l_scr[...])

    @pl.when(j >= num_n)  # pass 2: pure read + subtract (no matmul, no W DMA)
    def _():
        o_ref[...] = (cache_scr[j - num_n] - m_scr[...]).astype(o_ref.dtype)


# ----------------------------------------------------------------------------
# Variant B: HBM epilogue (for vocab too large to cache in VMEM, e.g. v7x).
#   Kernel 1 writes raw logits + per-row logsumexp in a single weight sweep;
#   kernel 2 is an elementwise subtract, aliased in-place over the raw logits.
# ----------------------------------------------------------------------------
def _proj_pass1_kernel(x_ref, w_ref, b_ref, logits_ref, lse_ref,
                       m_scr, l_scr, *, num_n, tn, vocab, ragged_v):
    j = pl.program_id(1)

    @pl.when(j == 0)
    def _():
        m_scr[...] = jnp.full_like(m_scr, -jnp.inf)
        l_scr[...] = jnp.zeros_like(l_scr)

    logits = jnp.dot(x_ref[...], w_ref[...], preferred_element_type=jnp.float32)
    logits = logits + b_ref[...].astype(jnp.float32)
    if ragged_v:
        col = j * tn + jax.lax.broadcasted_iota(jnp.int32, logits.shape, 1)
        logits = jnp.where(col < vocab, logits, -jnp.inf)

    logits_ref[...] = logits.astype(logits_ref.dtype)

    m_prev = m_scr[...]
    m_new = jnp.maximum(m_prev, jnp.max(logits, axis=-1, keepdims=True))
    l_scr[...] = (l_scr[...] * jnp.exp(m_prev - m_new)
                  + jnp.sum(jnp.exp(logits - m_new), axis=-1, keepdims=True))
    m_scr[...] = m_new

    @pl.when(j == num_n - 1)
    def _():
        lse_ref[...] = m_scr[...] + jnp.log(l_scr[...])


def _logsoftmax_epilogue_kernel(logits_ref, lse_ref, o_ref):
    o_ref[...] = (logits_ref[...].astype(jnp.float32)
                  - lse_ref[...]).astype(o_ref.dtype)


# ----------------------------------------------------------------------------
# Wrapper
# ----------------------------------------------------------------------------
@functools.partial(
    jax.jit,
    static_argnames=("block_m", "block_n", "compute_dtype", "out_dtype",
                     "logits_cache_budget"),
)
def projection_layer(x, w, b, *, block_m=None, block_n=512,
                     compute_dtype=jnp.bfloat16, out_dtype=jnp.float32,
                     logits_cache_budget=None):
    """Fused y = log_softmax(x @ w + b, axis=-1).

    x: (batch, seq, d_model); w: (d_model, vocab) (== nn.Linear weight.T);
    b: (vocab,).  Default compute_dtype=bfloat16 trades a ~2e-3-relative
    numeric delta for 2x weight bandwidth / MXU rate; pass float32 for exact
    parity with the PyTorch reference.  Store w in compute_dtype to also avoid
    the one-time cast copy.
    """
    batch, seq, d_model = x.shape
    vocab = w.shape[1]
    M = batch * seq

    vmem_cap = _vmem_capacity_bytes()
    if block_m is None:
        # v5e/v6e (128 MiB VMEM): large M tile to get MXU-bound; v7x (64 MiB):
        # 512 is already past its ~311 flop/byte compute-bound threshold.
        block_m = 768 if vmem_cap >= (96 << 20) else 512

    tm = _round_up(min(block_m, M), 16)
    tn = _round_up(min(block_n, vocab), 128)
    M_pad = _round_up(M, tm)
    num_m = M_pad // tm
    num_n = (vocab + tn - 1) // tn
    ragged_v = (num_n * tn) != vocab

    cbytes = jnp.dtype(compute_dtype).itemsize
    obytes = jnp.dtype(out_dtype).itemsize

    # Activations: flatten, cast, pad M (cheap — x is tiny next to the weight).
    x2 = x.reshape(M, d_model).astype(compute_dtype)
    if M_pad != M:
        x2 = jnp.pad(x2, ((0, M_pad - M), (0, 0)))
    # Weight is consumed directly — no padded HBM copy; ragged vocab is masked
    # in-kernel.  (Cast only if the caller didn't store it in compute_dtype.)
    w_c = w if w.dtype == jnp.dtype(compute_dtype) else w.astype(compute_dtype)
    b2 = b.astype(jnp.float32).reshape(1, vocab)

    # VMEM accounting (double-buffered pipeline tiles + logits cache).
    x_tile_b = tm * d_model * cbytes
    w_tile_b = d_model * tn * cbytes
    b_tile_b = tn * 4
    o_tile_b = tm * tn * obytes
    pipe_bytes = 2 * (x_tile_b + w_tile_b + b_tile_b + o_tile_b) + (2 << 20)
    cache_bytes = num_n * tm * tn * 4  # f32 cache => exact final subtraction

    budget = (int(0.75 * vmem_cap) if logits_cache_budget is None
              else int(logits_cache_budget))
    use_vmem_cache = (cache_bytes + pipe_bytes) <= budget

    vmem_ceiling = int(0.85 * vmem_cap)  # leave headroom for compiler scratch
    matmul_flops = 2 * M_pad * d_model * (num_n * tn)
    weight_bytes = num_m * d_model * num_n * tn * cbytes

    if use_vmem_cache:
        kernel = functools.partial(
            _proj_logsoftmax_cached_kernel,
            num_n=num_n, tn=tn, vocab=vocab, ragged_v=ragged_v)
        vmem_limit = int(min(max(cache_bytes + pipe_bytes + (4 << 20), 32 << 20),
                             vmem_ceiling))
        cost = pl.CostEstimate(
            flops=matmul_flops,
            transcendentals=M_pad * num_n * tn,
            bytes_accessed=(M_pad * d_model * cbytes + weight_bytes
                            + num_n * tn * 4 + M_pad * vocab * obytes),
        )
        out = pl.pallas_call(
            kernel,
            out_shape=jax.ShapeDtypeStruct((M_pad, vocab), out_dtype),
            grid_spec=pltpu.PrefetchScalarGridSpec(
                num_scalar_prefetch=0,
                grid=(num_m, 2 * num_n),  # (M tiles, pass * vocab tiles)
                in_specs=[
                    # x tile stays resident across the whole vocab sweep.
                    pl.BlockSpec((tm, d_model), lambda i, j: (i, 0)),
                    # Weight / bias: sweep in pass 1, PINNED in pass 2 (no
                    # re-fetch).  (pipeline_mode=pl.Buffered(3) is a further
                    # small win on v7x/v5e if VMEM allows.)
                    pl.BlockSpec((d_model, tn),
                                 lambda i, j: (0, jnp.minimum(j, num_n - 1))),
                    pl.BlockSpec((1, tn),
                                 lambda i, j: (0, jnp.minimum(j, num_n - 1))),
                ],
                # Held (unwritten) at (i, 0) through pass 1; each (i, jj) is
                # written exactly once in pass 2.
                out_specs=pl.BlockSpec(
                    (tm, tn), lambda i, j: (i, jnp.maximum(j - num_n, 0))),
                scratch_shapes=[
                    pltpu.VMEM((tm, 1), jnp.float32),          # running max / lse
                    pltpu.VMEM((tm, 1), jnp.float32),          # running sum-exp
                    pltpu.VMEM((num_n, tm, tn), jnp.float32),  # logits cache
                ],
            ),
            compiler_params=pltpu.CompilerParams(
                dimension_semantics=("parallel", "arbitrary"),
                vmem_limit_bytes=vmem_limit,
            ),
            cost_estimate=cost,
        )(x2, w_c, b2)
    else:
        # Pass 1: one weight sweep, raw logits + per-row logsumexp to HBM.
        kernel = functools.partial(
            _proj_pass1_kernel,
            num_n=num_n, tn=tn, vocab=vocab, ragged_v=ragged_v)
        vmem_limit = int(min(max(pipe_bytes + (4 << 20), 32 << 20), vmem_ceiling))
        cost = pl.CostEstimate(
            flops=matmul_flops,
            transcendentals=M_pad * num_n * tn,
            bytes_accessed=(M_pad * d_model * cbytes + weight_bytes
                            + num_n * tn * 4 + M_pad * vocab * obytes
                            + M_pad * 4),
        )
        logits_raw, lse = pl.pallas_call(
            kernel,
            out_shape=(jax.ShapeDtypeStruct((M_pad, vocab), out_dtype),
                       jax.ShapeDtypeStruct((M_pad, 1), jnp.float32)),
            grid_spec=pltpu.PrefetchScalarGridSpec(
                num_scalar_prefetch=0,
                grid=(num_m, num_n),
                in_specs=[
                    pl.BlockSpec((tm, d_model), lambda i, j: (i, 0)),
                    pl.BlockSpec((d_model, tn), lambda i, j: (0, j)),
                    pl.BlockSpec((1, tn), lambda i, j: (0, j)),
                ],
                out_specs=[
                    pl.BlockSpec((tm, tn), lambda i, j: (i, j)),
                    pl.BlockSpec((tm, 1), lambda i, j: (i, 0)),
                ],
                scratch_shapes=[
                    pltpu.VMEM((tm, 1), jnp.float32),
                    pltpu.VMEM((tm, 1), jnp.float32),
                ],
            ),
            compiler_params=pltpu.CompilerParams(
                dimension_semantics=("parallel", "arbitrary"),
                vmem_limit_bytes=vmem_limit,
            ),
            cost_estimate=cost,
        )(x2, w_c, b2)

        # Epilogue: out = logits - lse, in-place over the raw-logits buffer.
        out = pl.pallas_call(
            _logsoftmax_epilogue_kernel,
            out_shape=jax.ShapeDtypeStruct((M_pad, vocab), out_dtype),
            grid_spec=pltpu.PrefetchScalarGridSpec(
                num_scalar_prefetch=0,
                grid=(num_m, num_n),
                in_specs=[
                    pl.BlockSpec((tm, tn), lambda i, j: (i, j)),
                    pl.BlockSpec((tm, 1), lambda i, j: (i, 0)),
                ],
                out_specs=pl.BlockSpec((tm, tn), lambda i, j: (i, j)),
            ),
            compiler_params=pltpu.CompilerParams(
                dimension_semantics=("parallel", "parallel"),
            ),
            input_output_aliases={0: 0},
        )(logits_raw, lse)

    out = out[:M]
    return out.reshape(batch, seq, vocab)


if __name__ == "__main__":
    key = jax.random.PRNGKey(0)

    # --- Test 1: small shapes, f32 compute (exact parity), VMEM-cache path ---
    batch, seq, d_model, vocab_size = 2, 8, 32, 128
    kx, kw, kb = jax.random.split(key, 3)
    bound = 1.0 / (d_model ** 0.5)

    x = jax.random.normal(kx, (batch, seq, d_model), dtype=jnp.float32)
    w_t = jax.random.uniform(kw, (d_model, vocab_size),
                             minval=-bound, maxval=bound, dtype=jnp.float32)
    bias = jax.random.uniform(kb, (vocab_size,),
                              minval=-bound, maxval=bound, dtype=jnp.float32)

    out_f32 = projection_layer(x, w_t, bias, compute_dtype=jnp.float32)
    jax.block_until_ready(out_f32)
    ref_f32 = jax.nn.log_softmax(x @ w_t + bias, axis=-1)
    assert out_f32.shape == (batch, seq, vocab_size)
    assert jnp.allclose(out_f32, ref_f32, atol=1e-5, rtol=1e-5)

    # --- Test 2: default bf16 path, ragged M / ragged vocab, 3 vocab tiles ---
    b2_, s2_, d2_, v2_ = 2, 5, 32, 300
    k2 = jax.random.split(jax.random.PRNGKey(0), 3)
    x_b = jax.random.normal(k2[0], (b2_, s2_, d2_), dtype=jnp.float32)
    w_b = jax.random.uniform(k2[1], (d2_, v2_),
                             minval=-bound, maxval=bound, dtype=jnp.float32)
    bias_b = jax.random.uniform(k2[2], (v2_,),
                                minval=-bound, maxval=bound, dtype=jnp.float32)

    out_bf16 = projection_layer(x_b, w_b, bias_b, block_m=64, block_n=128)
    jax.block_until_ready(out_bf16)
    logits_ref = jnp.dot(x_b.astype(jnp.bfloat16), w_b.astype(jnp.bfloat16),
                         preferred_element_type=jnp.float32) + bias_b
    ref_bf16 = jax.nn.log_softmax(logits_ref, axis=-1)
    assert out_bf16.shape == (b2_, s2_, v2_)
    assert jnp.allclose(out_bf16, ref_bf16, atol=2e-4, rtol=2e-4)

    # --- Test 3: force the HBM-epilogue path (logits_cache_budget=0), f32 ---
    out_epi = projection_layer(x_b, w_b, bias_b, block_m=64, block_n=128,
                               compute_dtype=jnp.float32,
                               logits_cache_budget=0)
    jax.block_until_ready(out_epi)
    ref_epi = jax.nn.log_softmax(x_b @ w_b + bias_b, axis=-1)
    assert out_epi.shape == (b2_, s2_, v2_)
    assert jnp.allclose(out_epi, ref_epi, atol=1e-5, rtol=1e-5)

    print("KERNEL_OK")
</pallas_src>

<mosaic_0001>
module attributes {stable_mosaic.version = 11 : i64} {
  func.func @_proj_logsoftmax_cached_kernel(%arg0: i32, %arg1: i32, %arg2: memref<16x32xf32, #tpu.memory_space<vmem>>, %arg3: memref<32x128xf32, #tpu.memory_space<vmem>>, %arg4: memref<1x128xf32, #tpu.memory_space<vmem>>, %arg5: memref<16x128xf32, #tpu.memory_space<vmem>>, %arg6: memref<16x1xf32, #tpu.memory_space<vmem>>, %arg7: memref<16x1xf32, #tpu.memory_space<vmem>>, %arg8: memref<1x16x128xf32, #tpu.memory_space<vmem>>) attributes {dimension_semantics = [#tpu.dimension_semantics<parallel>, #tpu.dimension_semantics<arbitrary>], iteration_bounds = array<i64: 1, 2>, scalar_prefetch = 0 : i64, scratch_operands = 3 : i64, tpu.core_type = #tpu.core_type<tc>, window_params = [{transform_indices = @transform_0, window_bounds = array<i64: 16, 32>}, {transform_indices = @transform_1, window_bounds = array<i64: 32, 128>}, {transform_indices = @transform_2, window_bounds = array<i64: 1, 128>}, {transform_indices = @transform_3, window_bounds = array<i64: 16, 128>}]} {
    %c0_i32 = arith.constant 0 : i32
    %0 = arith.cmpi eq, %arg1, %c0_i32 : i32
    %1 = arith.extui %0 : i1 to i32
    %c0_i32_0 = arith.constant 0 : i32
    %2 = arith.cmpi ne, %1, %c0_i32_0 : i32
    scf.if %2 {
      %cst = arith.constant 0xFF800000 : f32
      %12 = vector.broadcast %cst : f32 to vector<16x1xf32>
      %c0 = arith.constant 0 : index
      %c0_6 = arith.constant 0 : index
      %13 = vector.load %arg6[%c0, %c0_6] : memref<16x1xf32, #tpu.memory_space<vmem>>, vector<16x1xf32>
      tpu.vector_store %arg6[%c0, %c0_6], %12 {strides = array<i32>} : memref<16x1xf32, #tpu.memory_space<vmem>>, vector<16x1xf32>,
      %cst_7 = arith.constant 0.000000e+00 : f32
      %14 = vector.broadcast %cst_7 : f32 to vector<16x1xf32>
      %c0_8 = arith.constant 0 : index
      %c0_9 = arith.constant 0 : index
      %15 = vector.load %arg7[%c0_8, %c0_9] : memref<16x1xf32, #tpu.memory_space<vmem>>, vector<16x1xf32>
      tpu.vector_store %arg7[%c0_8, %c0_9], %14 {strides = array<i32>} : memref<16x1xf32, #tpu.memory_space<vmem>>, vector<16x1xf32>,
    } else {
    }
    %c1_i32 = arith.constant 1 : i32
    %3 = arith.cmpi slt, %arg1, %c1_i32 : i32
    %4 = arith.extui %3 : i1 to i32
    %c0_i32_1 = arith.constant 0 : i32
    %5 = arith.cmpi ne, %4, %c0_i32_1 : i32
    scf.if %5 {
      %c0 = arith.constant 0 : index
      %c0_6 = arith.constant 0 : index
      %12 = vector.load %arg2[%c0, %c0_6] : memref<16x32xf32, #tpu.memory_space<vmem>>, vector<16x32xf32>
      %c0_7 = arith.constant 0 : index
      %c0_8 = arith.constant 0 : index
      %13 = vector.load %arg3[%c0_7, %c0_8] : memref<32x128xf32, #tpu.memory_space<vmem>>, vector<32x128xf32>
      %cst = arith.constant dense<0.000000e+00> : vector<16x128xf32>
      %14 = tpu.matmul %12, %13, %cst {dimension_numbers = #tpu.dot_dimension_numbers<[1], [0], [0], [1], [0, 0, 1, 1], [], []>} : vector<16x32xf32>, vector<32x128xf32>, vector<16x128xf32> -> vector<16x128xf32>
      %c0_9 = arith.constant 0 : index
      %c0_10 = arith.constant 0 : index
      %15 = vector.load %arg4[%c0_9, %c0_10] : memref<1x128xf32, #tpu.memory_space<vmem>>, vector<1x128xf32>
      %16 = vector.broadcast %15 : vector<1x128xf32> to vector<16x128xf32>
      %17 = arith.addf %14, %16 : vector<16x128xf32>
      %18 = arith.index_cast %arg1 : i32 to index
      %c0_11 = arith.constant 0 : index
      %c0_12 = arith.constant 0 : index
      %19 = vector.load %arg8[%18, %c0_11, %c0_12] : memref<1x16x128xf32, #tpu.memory_space<vmem>>, vector<1x16x128xf32>
      %20 = vector.shape_cast %19 : vector<1x16x128xf32> to vector<16x128xf32>
      %21 = vector.shape_cast %17 : vector<16x128xf32> to vector<1x16x128xf32>
      tpu.vector_store %arg8[%18, %c0_11, %c0_12], %21 {strides = array<i32>} : memref<1x16x128xf32, #tpu.memory_space<vmem>>, vector<1x16x128xf32>,
      %c0_13 = arith.constant 0 : index
      %c0_14 = arith.constant 0 : index
      %22 = vector.load %arg6[%c0_13, %c0_14] : memref<16x1xf32, #tpu.memory_space<vmem>>, vector<16x1xf32>
      %cst_15 = arith.constant dense<0xFF800000> : vector<16xf32>
      %23 = vector.multi_reduction <maximumf>, %17, %cst_15 [1] : vector<16x128xf32> to vector<16xf32>
      %24 = vector.shape_cast %23 : vector<16xf32> to vector<16x1xf32>
      %25 = arith.maximumf %22, %24 : vector<16x1xf32>
      %c0_16 = arith.constant 0 : index
      %c0_17 = arith.constant 0 : index
      %26 = vector.load %arg7[%c0_16, %c0_17] : memref<16x1xf32, #tpu.memory_space<vmem>>, vector<16x1xf32>
      %27 = arith.subf %22, %25 : vector<16x1xf32>
      %28 = math.exp %27 : vector<16x1xf32>
      %29 = arith.mulf %26, %28 : vector<16x1xf32>
      %30 = vector.broadcast %25 : vector<16x1xf32> to vector<16x128xf32>
      %31 = arith.subf %17, %30 : vector<16x128xf32>
      %32 = math.exp %31 : vector<16x128xf32>
      %cst_18 = arith.constant dense<0.000000e+00> : vector<16xf32>
      %33 = vector.multi_reduction <add>, %32, %cst_18 [1] : vector<16x128xf32> to vector<16xf32>
      %34 = vector.shape_cast %33 : vector<16xf32> to vector<16x1xf32>
      %35 = arith.addf %29, %34 : vector<16x1xf32>
      %c0_19 = arith.constant 0 : index
      %c0_20 = arith.constant 0 : index
      %36 = vector.load %arg7[%c0_19, %c0_20] : memref<16x1xf32, #tpu.memory_space<vmem>>, vector<16x1xf32>
      tpu.vector_store %arg7[%c0_19, %c0_20], %35 {strides = array<i32>} : memref<16x1xf32, #tpu.memory_space<vmem>>, vector<16x1xf32>,
      %c0_21 = arith.constant 0 : index
      %c0_22 = arith.constant 0 : index
      %37 = vector.load %arg6[%c0_21, %c0_22] : memref<16x1xf32, #tpu.memory_space<vmem>>, vector<16x1xf32>
      tpu.vector_store %arg6[%c0_21, %c0_22], %25 {strides = array<i32>} : memref<16x1xf32, #tpu.memory_space<vmem>>, vector<16x1xf32>,
    } else {
    }
    %c1_i32_2 = arith.constant 1 : i32
    %6 = arith.cmpi eq, %arg1, %c1_i32_2 : i32
    %7 = arith.extui %6 : i1 to i32
    %c0_i32_3 = arith.constant 0 : i32
    %8 = arith.cmpi ne, %7, %c0_i32_3 : i32
    scf.if %8 {
      %c0 = arith.constant 0 : index
      %c0_6 = arith.constant 0 : index
      %12 = vector.load %arg6[%c0, %c0_6] : memref<16x1xf32, #tpu.memory_space<vmem>>, vector<16x1xf32>
      %c0_7 = arith.constant 0 : index
      %c0_8 = arith.constant 0 : index
      %13 = vector.load %arg7[%c0_7, %c0_8] : memref<16x1xf32, #tpu.memory_space<vmem>>, vector<16x1xf32>
      %14 = math.log %13 : vector<16x1xf32>
      %15 = arith.addf %12, %14 : vector<16x1xf32>
      %c0_9 = arith.constant 0 : index
      %c0_10 = arith.constant 0 : index
      %16 = vector.load %arg6[%c0_9, %c0_10] : memref<16x1xf32, #tpu.memory_space<vmem>>, vector<16x1xf32>
      tpu.vector_store %arg6[%c0_9, %c0_10], %15 {strides = array<i32>} : memref<16x1xf32, #tpu.memory_space<vmem>>, vector<16x1xf32>,
    } else {
    }
    %c1_i32_4 = arith.constant 1 : i32
    %9 = arith.cmpi sge, %arg1, %c1_i32_4 : i32
    %10 = arith.extui %9 : i1 to i32
    %c0_i32_5 = arith.constant 0 : i32
    %11 = arith.cmpi ne, %10, %c0_i32_5 : i32
    scf.if %11 {
      %c1_i32_6 = arith.constant 1 : i32
      %12 = arith.subi %arg1, %c1_i32_6 : i32
      %13 = arith.index_cast %12 : i32 to index
      %c0 = arith.constant 0 : index
      %c0_7 = arith.constant 0 : index
      %14 = vector.load %arg8[%13, %c0, %c0_7] : memref<1x16x128xf32, #tpu.memory_space<vmem>>, vector<1x16x128xf32>
      %15 = vector.shape_cast %14 : vector<1x16x128xf32> to vector<16x128xf32>
      %c0_8 = arith.constant 0 : index
      %c0_9 = arith.constant 0 : index
      %16 = vector.load %arg6[%c0_8, %c0_9] : memref<16x1xf32, #tpu.memory_space<vmem>>, vector<16x1xf32>
      %17 = vector.broadcast %16 : vector<16x1xf32> to vector<16x128xf32>
      %18 = arith.subf %15, %17 : vector<16x128xf32>
      %c0_10 = arith.constant 0 : index
      %c0_11 = arith.constant 0 : index
      %19 = vector.load %arg5[%c0_10, %c0_11] : memref<16x128xf32, #tpu.memory_space<vmem>>, vector<16x128xf32>
      tpu.vector_store %arg5[%c0_10, %c0_11], %18 {strides = array<i32>} : memref<16x128xf32, #tpu.memory_space<vmem>>, vector<16x128xf32>,
    } else {
    }
    return
  }
  func.func @transform_0(%arg0: i32, %arg1: i32) -> (i32, i32) {
    %c0_i32 = arith.constant 0 : i32
    %c0_i32_0 = arith.constant 0 : i32
    return %arg0, %c0_i32 : i32, i32
  }
  func.func @transform_1(%arg0: i32, %arg1: i32) -> (i32, i32) {
    %c0_i32 = arith.constant 0 : i32
    %0 = arith.minsi %arg1, %c0_i32 : i32
    %c0_i32_0 = arith.constant 0 : i32
    %c0_i32_1 = arith.constant 0 : i32
    return %c0_i32_0, %0 : i32, i32
  }
  func.func @transform_2(%arg0: i32, %arg1: i32) -> (i32, i32) {
    %c0_i32 = arith.constant 0 : i32
    %0 = arith.minsi %arg1, %c0_i32 : i32
    %c0_i32_0 = arith.constant 0 : i32
    %c0_i32_1 = arith.constant 0 : i32
    return %c0_i32_0, %0 : i32, i32
  }
  func.func @transform_3(%arg0: i32, %arg1: i32) -> (i32, i32) {
    %c1_i32 = arith.constant 1 : i32
    %0 = arith.subi %arg1, %c1_i32 : i32
    %c0_i32 = arith.constant 0 : i32
    %1 = arith.maxsi %0, %c0_i32 : i32
    %c0_i32_0 = arith.constant 0 : i32
    return %arg0, %1 : i32, i32
  }
}

</mosaic_0001>

<llo_original>
// kernel: projection_layer.1
$region0: #{projection_layer.1}
  #allocation0 [shape = 'u32[]', space=smem, size = 0x4, offset = 0x4, fixed_abs, tag = 'smem constant byte address 0x4 - core index']
  #allocation1 [shape = 'u32[144,128]{1,0:T(1,128)}', space=vmem, size = 0x12000, scoped, tag = 'internal scratch']
  #allocation2 [shape = 'f32[16,1]{1,0:T(8,128)}', space=vmem, size = 0x2000, scoped, tag = 'scratch operand']
  #allocation3 [shape = 'f32[16,1]{1,0:T(8,128)}', space=vmem, size = 0x2000, scoped, tag = 'scratch operand']
  #allocation4 [shape = 'f32[1,16,128]{2,1,0:T(8,128)}', space=vmem, size = 0x2000, scoped, tag = 'scratch operand']
  %s0 = inlined_call_operand.hbm [shape: f32[16,32], index: 0, kind: input, shape index: {}]
  %s1 = inlined_call_operand.hbm [shape: f32[32,128], index: 1, kind: input, shape index: {}]
  %s2 = inlined_call_operand.vmem [shape: f32[1,128], index: 2, kind: input, shape index: {}]
  %s3 = inlined_call_operand.hbm [shape: f32[16,128], index: 3, kind: output, shape index: {}]
  %s4 = sld [smem:[#allocation0]]
  $region69: #{projection_layer.1} parent=0
    _
  %s6 = ssub.s32 1, %s4
  %s7 = scalar_select 0, %s6, %s4
  $region1: #{projection_layer.1} parent=0
    #allocation5 [shape = 'u8[8192]{0}', space=vmem, size = 0x2000, scoped, tag = 'input window, operand 0, single buffered']
    #allocation6 [shape = 's32[2]{0}', space=sflag, size = 0x8, scoped, tag = 'scoped memory for projection_layer.1']
    #allocation7 [shape = 's32[2]{0}', space=sflag, size = 0x8, scoped, tag = 'scoped memory for projection_layer.1']
    #allocation8 [shape = 'u8[32768]{0}', space=vmem, size = 0x8000, scoped, tag = 'input window, operand 1']
    #allocation9 [shape = 's32[2]{0}', space=sflag, size = 0x8, scoped, tag = 'scoped memory for projection_layer.1']
    #allocation10 [shape = 'u8[16384]{0}', space=vmem, size = 0x4000, scoped, tag = 'output window, operand 0']
    %8 = vsyncpa [#allocation6], 0
    %9 = vsyncpa [#allocation9], 0
    %s10 = scalar_lea.sflag [#allocation9], 1
    %11 = vsyncpa %s10, 0
    %12 = vsyncpa [#allocation7], 0
    %s13 = scalar_lea.sflag [#allocation7], 1
    %14 = vsyncpa %s13, 0
    loop: start=0, step=1, limit=4
    $region2: #{projection_layer.1} parent=1 // loop_pre_header
      _
    $region3: #{projection_layer.1} parent=1 // loop_header
      %s16 = sphi 0, %s20
      %p17 = scmp.ge.s32.totalorder %s16, 4
      %s23 = sphi 0, %s35
      %s24 = sphi 0, %s31
      %s25 = sphi 0, %s23
      %s26 = sphi 0, %s24
      %s27 = sphi 0, %s25
      %s28 = sphi 0, %s26
      %s38 = sphi 0, %s40
      %s41 = sphi 0, %s38
      %s42 = sphi 0, %s41
      %s58 = sphi 0, %s42
      %s68 = sphi 0, %s70
      %s71 = sphi 0, %s68
      %s72 = sphi 0, %s71
      %s88 = sphi 0, %s72
      %s98 = sphi 0, %s100
      %s101 = sphi 0, %s98
      %s102 = sphi 0, %s101
      %s118 = sphi 0, %s102
      %s132 = sphi 0, %s134
      %s135 = sphi 0, %s132
      %s136 = sphi 0, %s135
      %s152 = sphi 0, %s136
    $region4: #{projection_layer.1} parent=1 // loop_header_branch
      %19 = sbr.rel (%p17) target = $region8
    $region5: #{projection_layer.1} parent=1 // loop_body
      %s21 = ssub.s32 %s16, 1
      %s22 = ssub.s32 %s16, 2
      %s29 = sadd.s32 1, %s24
      %p30 = scmp.ge.s32.totalorder %s29, 2
      %s31 = scalar_select %p30, 0, %s29
      %s32 = sadd.s32 1, %s23
      %s33 = scalar_select %p30, %s32, %s23
      %p34 = scmp.ge.s32.totalorder %s33, 1
      %s35 = scalar_select %p34, 0, %s33
      %s36 = ssub.s32 %s23, %s35
      %p37 = scmp.eq.s32.totalorder %s36, 0
      %s39 = sadd.s32 %s38, 1
      %s40 = scalar_select %p37, %s38, %s39
      %p43 = pneg %p37
      %p44 = scmp.eq.s32.totalorder %s16, 1
      %p45 = por %p43, %p44
      %p46 = scmp.ne.s32.totalorder %s38, %s41
      %p47 = scmp.eq.s32.totalorder %s16, 0
      %p48 = por %p46, %p47
      %p49 = scmp.ne.s32.totalorder %s38, %s41
      %p50 = scmp.eq.s32.totalorder %s21, 1
      %p51 = por %p49, %p50
      %p52 = scmp.ne.s32.totalorder %s41, %s42
      %p53 = scmp.eq.s32.totalorder %s21, 0
      %p54 = por %p52, %p53
      %p55 = scmp.ne.s32.totalorder %s41, %s42
      %p56 = scmp.eq.s32.totalorder %s22, 1
      %p57 = por %p55, %p56
      %p59 = scmp.ne.s32.totalorder %s42, %s58
      %p60 = scmp.eq.s32.totalorder %s22, 0
      %p61 = por %p59, %p60
      %p62 = scmp.lt.s32.totalorder %s24, 0
      %s63 = scalar_select %p62, %s24, 0
      %p64 = scmp.lt.s32.totalorder %s31, 0
      %s65 = scalar_select %p64, %s31, 0
      %s66 = ssub.s32 %s63, %s65
      %p67 = scmp.eq.s32.totalorder %s66, 0
      %s69 = sadd.s32 %s68, 1
      %s70 = scalar_select %p67, %s68, %s69
      %p73 = pneg %p67
      %p74 = scmp.eq.s32.totalorder %s16, 1
      %p75 = por %p73, %p74
      %p76 = scmp.ne.s32.totalorder %s68, %s71
      %p77 = scmp.eq.s32.totalorder %s16, 0
      %p78 = por %p76, %p77
      %p79 = scmp.ne.s32.totalorder %s68, %s71
      %p80 = scmp.eq.s32.totalorder %s21, 1
      %p81 = por %p79, %p80
      %p82 = scmp.ne.s32.totalorder %s71, %s72
      %p83 = scmp.eq.s32.totalorder %s21, 0
      %p84 = por %p82, %p83
      %p85 = scmp.ne.s32.totalorder %s71, %s72
      %p86 = scmp.eq.s32.totalorder %s22, 1
      %p87 = por %p85, %p86
      %p89 = scmp.ne.s32.totalorder %s72, %s88
      %p90 = scmp.eq.s32.totalorder %s22, 0
      %p91 = por %p89, %p90
      %p92 = scmp.lt.s32.totalorder %s24, 0
      %s93 = scalar_select %p92, %s24, 0
      %p94 = scmp.lt.s32.totalorder %s31, 0
      %s95 = scalar_select %p94, %s31, 0
      %s96 = ssub.s32 %s93, %s95
      %p97 = scmp.eq.s32.totalorder %s96, 0
      %s99 = sadd.s32 %s98, 1
      %s100 = scalar_select %p97, %s98, %s99
      %p103 = pneg %p97
      %p104 = scmp.eq.s32.totalorder %s16, 1
      %p105 = por %p103, %p104
      %p106 = scmp.ne.s32.totalorder %s98, %s101
      %p107 = scmp.eq.s32.totalorder %s16, 0
      %p108 = por %p106, %p107
      %p109 = scmp.ne.s32.totalorder %s98, %s101
      %p110 = scmp.eq.s32.totalorder %s21, 1
      %p111 = por %p109, %p110
      %p112 = scmp.ne.s32.totalorder %s101, %s102
      %p113 = scmp.eq.s32.totalorder %s21, 0
      %p114 = por %p112, %p113
      %p115 = scmp.ne.s32.totalorder %s101, %s102
      %p116 = scmp.eq.s32.totalorder %s22, 1
      %p117 = por %p115, %p116
      %p119 = scmp.ne.s32.totalorder %s102, %s118
      %p120 = scmp.eq.s32.totalorder %s22, 0
      %p121 = por %p119, %p120
      %s122 = ssub.s32 %s24, 1
      %p123 = scmp.gt.s32.totalorder %s122, 0
      %s124 = scalar_select %p123, %s122, 0
      %s125 = ssub.s32 %s31, 1
      %p126 = scmp.gt.s32.totalorder %s125, 0
      %s127 = scalar_select %p126, %s125, 0
      %s128 = ssub.s32 %s23, %s35
      %s129 = ssub.s32 %s124, %s127
      %s130 = sor.u32 %s128, %s129
      %p131 = scmp.eq.s32.totalorder %s130, 0
      %s133 = sadd.s32 %s132, 1
      %s134 = scalar_select %p131, %s132, %s133
      %p137 = pneg %p131
      %p138 = scmp.eq.s32.totalorder %s16, 1
      %p139 = por %p137, %p138
      %p140 = scmp.ne.s32.totalorder %s132, %s135
      %p141 = scmp.eq.s32.totalorder %s16, 0
      %p142 = por %p140, %p141
      %p143 = scmp.ne.s32.totalorder %s132, %s135
      %p144 = scmp.eq.s32.totalorder %s21, 1
      %p145 = por %p143, %p144
      %p146 = scmp.ne.s32.totalorder %s135, %s136
      %p147 = scmp.eq.s32.totalorder %s21, 0
      %p148 = por %p146, %p147
      %p149 = scmp.ne.s32.totalorder %s135, %s136
      %p150 = scmp.eq.s32.totalorder %s22, 1
      %p151 = por %p149, %p150
      %p153 = scmp.ne.s32.totalorder %s136, %s152
      %p154 = scmp.eq.s32.totalorder %s22, 0
      %p155 = por %p153, %p154
      %p156 = scmp.le.s32.totalorder 1, %s16
      %p157 = scmp.lt.s32.totalorder %s16, 3
      %p158 = pnand %p156, %p157
      %p159 = pneg %p158
      // Predicated region
      $region9: #{projection_layer.1} parent=5 // pred_check
        _
      $region10: #{projection_layer.1} parent=5 // pred_check_branch
        %161 = sbr.rel (%p158) target = $region12
      $region11: #{projection_layer.1} parent=5 // pred_region
        %s162 = ssub.s32 %s16, 1
        // Predicated region
        $region13: #{projection_layer.1} parent=11 // pred_check
          %p163 = pneg %p54
        $region14: #{projection_layer.1} parent=11 // pred_check_branch
          %165 = sbr.rel (%p163) target = $region16
        $region15: #{projection_layer.1} parent=11 // pred_region
          %s166 = smul.u32 2, %s25
          %s168 = ssub.s32 256, 256
          %169 = vsyncadd [#allocation6], %s168
          %s170 = smul.addr %s166, 128
          %s171 = scalar_lea.hbm %s0, %s170
          %s172 = sshll.u32 [#allocation5], 4
          %s173 = int_to_ptr.vmem [resolvable:$true] %s172
          %178 = dma.hbm_to_vmem [thread:$0]  %s171, 256, %s173, [#allocation6], 128, 128, 8
        $region16: #{projection_layer.1} parent=11 // pred_fallthru
          _
      $region12: #{projection_layer.1} parent=5 // pred_fallthru
        _
      %p179 = scmp.lt.s32.totalorder %s16, 2
      // Predicated region
      $region17: #{projection_layer.1} parent=5 // pred_check
        %p180 = pneg %p179
      $region18: #{projection_layer.1} parent=5 // pred_check_branch
        %182 = sbr.rel (%p180) target = $region20
      $region19: #{projection_layer.1} parent=5 // pred_region
        // Predicated region
        $region21: #{projection_layer.1} parent=19 // pred_check
          %p183 = pneg %p78
        $region22: #{projection_layer.1} parent=19 // pred_check_branch
          %185 = sbr.rel (%p183) target = $region24
        $region23: #{projection_layer.1} parent=19 // pred_region
          %s186 = sand.u32 %s68, 1
          %s187 = scalar_lea.sflag [#allocation9], %s186
          %s188 = sand.u32 %s68, 1
          %s189 = smul.addr %s188, 32
          %s190 = scalar_lea.vmem [#allocation8], %s189
          %p191 = scmp.lt.s32.totalorder %s24, 0
          %s192 = scalar_select %p191, %s24, 0
          %s194 = ssub.s32 512, 512
          %195 = vsyncadd %s187, %s194
          %s196 = smul.addr %s192, 128
          %s197 = scalar_lea.hbm %s1, %s196
          %s198 = sshll.u32 %s190, 4
          %s199 = int_to_ptr.vmem [resolvable:$true] %s198
          %204 = dma.hbm_to_vmem [thread:$0]  %s197, 512, %s199, %s187, 128, 128, 8
        $region24: #{projection_layer.1} parent=19 // pred_fallthru
          _
        // Predicated region
        $region25: #{projection_layer.1} parent=19 // pred_check
          %p205 = pneg %p108
        $region26: #{projection_layer.1} parent=19 // pred_check_branch
          %207 = sbr.rel (%p205) target = $region28
        $region27: #{projection_layer.1} parent=19 // pred_region
          %p208 = scmp.lt.s32.totalorder %s24, 0
          %s209 = scalar_select %p208, %s24, 0
          %p210 = scmp.lt.s32.totalorder %s209, 0
          %s211 = scalar_select %p210, %s209, 0
          %s212 = scalar_lea.vmem %s2, %s211
          %p213 = scmp.lt.s32.totalorder %s24, 0
          %s214 = scalar_select %p213, %s24, 0
        $region28: #{projection_layer.1} parent=19 // pred_fallthru
          _
      $region20: #{projection_layer.1} parent=5 // pred_fallthru
        _
      %p215 = scmp.le.s32.totalorder 1, %s16
      %p216 = scmp.lt.s32.totalorder %s16, 3
      %p217 = pnand %p215, %p216
      %p218 = pneg %p217
      // Predicated region
      $region29: #{projection_layer.1} parent=5 // pred_check
        _
      $region30: #{projection_layer.1} parent=5 // pred_check_branch
        %220 = sbr.rel (%p217) target = $region32
      $region31: #{projection_layer.1} parent=5 // pred_region
        %s221 = ssub.s32 %s16, 1
        // Predicated region
        $region33: #{projection_layer.1} parent=31 // pred_check
          %p222 = pneg %p54
        $region34: #{projection_layer.1} parent=31 // pred_check_branch
          %224 = sbr.rel (%p222) target = $region36
        $region35: #{projection_layer.1} parent=31 // pred_region
          %225 = dma.done [#allocation6], 256
        $region36: #{projection_layer.1} parent=31 // pred_fallthru
          _
        %s226 = sand.u32 %s71, 1
        %s227 = scalar_lea.sflag [#allocation9], %s226
        %s228 = sand.u32 %s71, 1
        %s229 = smul.addr %s228, 32
        %s230 = scalar_lea.vmem [#allocation8], %s229
        // Predicated region
        $region37: #{projection_layer.1} parent=31 // pred_check
          %p231 = pneg %p84
        $region38: #{projection_layer.1} parent=31 // pred_check_branch
          %233 = sbr.rel (%p231) target = $region40
        $region39: #{projection_layer.1} parent=31 // pred_region
          %234 = dma.done %s227, 512
        $region40: #{projection_layer.1} parent=31 // pred_fallthru
          _
        %p235 = pneg %p54
        %p236 = pneg %p51
        %s237 = sand.u32 %s71, 1
        %s238 = scalar_lea.sflag [#allocation9], %s237
        %s239 = sand.u32 %s71, 1
        %s240 = smul.addr %s239, 32
        %s241 = scalar_lea.vmem [#allocation8], %s240
        %p242 = pneg %p84
        %p243 = pneg %p81
        %p244 = scmp.lt.s32.totalorder %s26, 0
        %s245 = scalar_select %p244, %s26, 0
        %p246 = scmp.lt.s32.totalorder %s245, 0
        %s247 = scalar_select %p246, %s245, 0
        %s248 = scalar_lea.vmem %s2, %s247
        %p249 = pneg %p114
        %p250 = pneg %p111
        %p251 = pneg %p148
        %p252 = pneg %p145
        %s253 = sand.u32 %s135, 1
        %s254 = scalar_lea.sflag [#allocation7], %s253
        %s255 = sand.u32 %s135, 1
        %s256 = smul.addr %s255, 16
        %s257 = scalar_lea.vmem [#allocation10], %s256
        %s258 = smul.u32 2, %s25
        %p259 = scmp.lt.s32.totalorder %s26, 0
        %s260 = scalar_select %p259, %s26, 0
        %p261 = scmp.lt.s32.totalorder %s26, 0
        %s262 = scalar_select %p261, %s26, 0
        %p263 = scmp.lt.s32.totalorder %s262, 0
        %s264 = scalar_select %p263, %s262, 0
        %s265 = scalar_lea.vmem %s2, %s264
        %p266 = scmp.lt.s32.totalorder %s26, 0
        %s267 = scalar_select %p266, %s26, 0
        %s268 = ssub.s32 %s26, 1
        %p269 = scmp.gt.s32.totalorder %s268, 0
        %s270 = scalar_select %p269, %s268, 0
        %s271 = smul.u32 2, %s25
        %p272 = scmp.eq.s32.totalorder %s26, 0
        // Predicated region
        $region41: #{projection_layer.1} parent=31 // pred_check
          %p273 = pneg %p272
        $region42: #{projection_layer.1} parent=31 // pred_check_branch
          %275 = sbr.rel (%p273) target = $region44
        $region43: #{projection_layer.1} parent=31 // pred_region
          %vm276 = vcmask 7168
          %277 = vst.msk [vmem:[#allocation2] sm:$0xff] %vm276, -inf
          %278 = vst.msk [vmem:[#allocation2 + $0x8] sm:$0xff] %vm276, -inf
          %279 = vst.msk [vmem:[#allocation3] sm:$0xff] %vm276, 0.0
          %280 = vst.msk [vmem:[#allocation3 + $0x8] sm:$0xff] %vm276, 0.0
        $region44: #{projection_layer.1} parent=31 // pred_fallthru
          _
        %p281 = scmp.lt.s32.totalorder %s26, 1
        // Predicated region
        $region45: #{projection_layer.1} parent=31 // pred_check
          %p282 = pneg %p281
        $region46: #{projection_layer.1} parent=31 // pred_check_branch
          %284 = sbr.rel (%p282) target = $region48
        $region47: #{projection_layer.1} parent=31 // pred_region
          %v285 = vld [vmem:[#allocation5] sm:$0xff]
          %v286 = vld [vmem:[#allocation5 + $0x8] sm:$0xff]
          %v287 = vld [vmem:[%s230] sm:$0xff]
          %v288 = vld [vmem:[%s230 + $0x8] sm:$0xff]
          %v289 = vld [vmem:[%s230 + $0x10] sm:$0xff]
          %v290 = vld [vmem:[%s230 + $0x18] sm:$0xff]
          %v291 = vld [vmem:[%s265] sm:$0x1]
          %v293 = vlaneseq
          %v294 = vshrl.u32 %v293, 7
          %v295 = vsub.s32 0, %v294
          %v296 = vrot.slane %v291, %v295
          %vm298 = vcmask 261120
          %v300 = vsel %vm298, %v285, 0
          %v303 = vsel %vm298, %v286, 0
          %305 = vmatprep.subr.mxu0 0.0
          %306 = vmatpush1.msra.mxu0 %v287
          %307 = vmatprep.subr.mxu0 0.0
          %308 = vmatpush1.msra.mxu0 %v288
          %309 = vmatprep.subr.mxu0 0.0
          %310 = vmatpush1.msra.mxu0 %v289
          %311 = vmatprep.subr.mxu0 0.0
          %312 = vmatpush1.msra.mxu0 %v290
          %313 = vmatprep.subr.mxu0 0.0
          %314 = vmatpush1.msra.mxu0 0.0
          %315 = vmatprep.subr.mxu0 0.0
          %316 = vmatpush1.msra.mxu0 0.0
          %317 = vmatprep.subr.mxu0 0.0
          %318 = vmatpush1.msra.mxu0 0.0
          %319 = vmatprep.subr.mxu0 0.0
          %320 = vmatpush1.msra.mxu0 0.0
          %321 = vmatprep.subr.mxu0 0.0
          %322 = vmatpush1.msra.mxu0 0.0
          %323 = vmatprep.subr.mxu0 0.0
          %324 = vmatpush1.msra.mxu0 0.0
          %325 = vmatprep.subr.mxu0 0.0
          %326 = vmatpush1.msra.mxu0 0.0
          %327 = vmatprep.subr.mxu0 0.0
          %328 = vmatpush1.msra.mxu0 0.0
          %329 = vmatprep.subr.mxu0 0.0
          %330 = vmatpush1.msra.mxu0 0.0
          %331 = vmatprep.subr.mxu0 0.0
          %332 = vmatpush1.msra.mxu0 0.0
          %333 = vmatprep.subr.mxu0 0.0
          %334 = vmatpush1.msra.mxu0 0.0
          %335 = vmatprep.subr.mxu0 0.0
          %336 = vmatpush1.msra.mxu0 0.0
          %337 = vmatprep.subr.mxu0 0.0
          %338 = vmatpush1.msra.mxu0 0.0
          %339 = vmatprep.subr.mxu0 0.0
          %340 = vmatpush1.msra.mxu0 0.0
          %341 = vmatprep.subr.mxu0 0.0
          %342 = vmatpush1.msra.mxu0 0.0
          %343 = vmatprep.subr.mxu0 0.0
          %344 = vmatpush1.msra.mxu0 0.0
          %345 = vmatprep.subr.mxu0 0.0
          %346 = vmatpush1.msra.mxu0 0.0
          %347 = vmatprep.subr.mxu0 0.0
          %348 = vmatpush1.msra.mxu0 0.0
          %349 = vmatprep.subr.mxu0 0.0
          %350 = vmatpush1.msra.mxu0 0.0
          %351 = vmatprep.subr.mxu0 0.0
          %352 = vmatpush1.msra.mxu0 0.0
          %353 = vmatprep.subr.mxu0 0.0
          %354 = vmatpush1.msra.mxu0 0.0
          %355 = vmatprep.subr.mxu0 0.0
          %356 = vmatpush1.msra.mxu0 0.0
          %357 = vmatprep.subr.mxu0 0.0
          %358 = vmatpush1.msra.mxu0 0.0
          %359 = vmatprep.subr.mxu0 0.0
          %360 = vmatpush1.msra.mxu0 0.0
          %361 = vmatprep.subr.mxu0 0.0
          %362 = vmatpush1.msra.mxu0 0.0
          %363 = vmatprep.subr.mxu0 0.0
          %364 = vmatpush1.msra.mxu0 0.0
          %365 = vmatprep.subr.mxu0 0.0
          %366 = vmatpush1.msra.mxu0 0.0
          %367 = vmatprep.subr.mxu0 0.0
          %368 = vmatpush1.msra.mxu0 0.0
          %369 = vmatprep.mubr.f32.mxu0 0.0
          %370 = vmatmul.mubr.f32.gmra.mrb[0].mxu0 %v300
          %v371 = vpop.f32.mrb[0].mxu0
          %v372 = vadd.f32 %v296, %v371
          %v373 = vpop.f32.mrb[0].mxu0
          %374 = vmatprep.mubr.f32.mxu0 0.0
          %375 = vmatmul.mubr.f32.gmra.mrb[0].mxu0 %v303
          %v376 = vpop.f32.mrb[0].mxu0
          %v377 = vadd.f32 %v296, %v376
          %v378 = vpop.f32.mrb[0].mxu0
          %379 = vdwg.mxu0
          %s380 = smul.u32 %s26, 16
          %s381 = scalar_lea.vmem [#allocation4], %s380
          %382 = vst [vmem:[%s381] sm:$0xff] %v372
          %383 = vst [vmem:[%s381 + $0x8] sm:$0xff] %v377
          %v384 = vld [vmem:[#allocation2] sm:$0xff]
          %v385 = vld [vmem:[#allocation2 + $0x8] sm:$0xff]
          %386 = vmax.xlane.f32.xlu0 %v372
          %v387 = vpop.xlane.xlu0 %386
          %388 = vmax.xlane.f32.xlu0 %v377
          %v389 = vpop.xlane.xlu0 %388
          %v390 = vmax.f32 %v384, %v387
          %v391 = vmax.f32 %v385, %v389
          %v392 = vld [vmem:[#allocation3] sm:$0xff]
          %v393 = vld [vmem:[#allocation3 + $0x8] sm:$0xff]
          %v394 = vsub.f32 %v384, %v390
          %v395 = vsub.f32 %v385, %v391
          %v396 = vmul.f32 %v394, 1.442695
          %v397 = vpow.pop %v396
          %v398 = vmul.f32 %v395, 1.442695
          %v399 = vpow.pop %v398
          %v400 = vmul.f32 %v392, %v397
          %v401 = vmul.f32 %v393, %v399
          %403 = vset.pattern.permute.xlu0 0
          %404 = vperm.xlu0 %403, %v390
          %v405 = vpop.permute.xlu0 %404
          %408 = vset.pattern.permute.xlu0 0
          %409 = vperm.xlu0 %408, %v391
          %v410 = vpop.permute.xlu0 %409
          %v412 = vsub.f32 %v372, %v405
          %v413 = vsub.f32 %v377, %v410
          %v414 = vmul.f32 %v412, 1.442695
          %v415 = vpow.pop %v414
          %v416 = vmul.f32 %v413, 1.442695
          %v417 = vpow.pop %v416
          %418 = vadd.xlane.f32.xlu0 %v415
          %v419 = vpop.xlane.xlu0 %418
          %420 = vadd.xlane.f32.xlu0 %v417
          %v421 = vpop.xlane.xlu0 %420
          %v422 = vadd.f32 %v400, %v419
          %v423 = vadd.f32 %v401, %v421
          %vm424 = vcmask 7168
          %425 = vst.msk [vmem:[#allocation3] sm:$0xff] %vm424, %v422
          %426 = vst.msk [vmem:[#allocation3 + $0x8] sm:$0xff] %vm424, %v423
          %427 = vst.msk [vmem:[#allocation2] sm:$0xff] %vm424, %v390
          %428 = vst.msk [vmem:[#allocation2 + $0x8] sm:$0xff] %vm424, %v391
        $region48: #{projection_layer.1} parent=31 // pred_fallthru
          _
        %p429 = scmp.eq.s32.totalorder %s26, 1
        // Predicated region
        $region49: #{projection_layer.1} parent=31 // pred_check
          %p430 = pneg %p429
        $region50: #{projection_layer.1} parent=31 // pred_check_branch
          %432 = sbr.rel (%p430) target = $region52
        $region51: #{projection_layer.1} parent=31 // pred_region
          %v433 = vld [vmem:[#allocation2] sm:$0xff]
          %v434 = vld [vmem:[#allocation2 + $0x8] sm:$0xff]
          %v435 = vld [vmem:[#allocation3] sm:$0xff]
          %v436 = vld [vmem:[#allocation3 + $0x8] sm:$0xff]
          %v437 = vlog2.pop %v435
          %v438 = vmul.f32 %v437, 0.6931472
          %v439 = vlog2.pop %v436
          %v440 = vmul.f32 %v439, 0.6931472
          %v441 = vadd.f32 %v433, %v438
          %v442 = vadd.f32 %v434, %v440
          %vm443 = vcmask 7168
          %444 = vst.msk [vmem:[#allocation2] sm:$0xff] %vm443, %v441
          %445 = vst.msk [vmem:[#allocation2 + $0x8] sm:$0xff] %vm443, %v442
        $region52: #{projection_layer.1} parent=31 // pred_fallthru
          _
        %p446 = scmp.ge.s32.totalorder %s26, 1
        // Predicated region
        $region53: #{projection_layer.1} parent=31 // pred_check
          %p447 = pneg %p446
        $region54: #{projection_layer.1} parent=31 // pred_check_branch
          %449 = sbr.rel (%p447) target = $region56
        $region55: #{projection_layer.1} parent=31 // pred_region
          %s450 = ssub.s32 %s26, 1
          %s451 = smul.u32 %s450, 16
          %s452 = scalar_lea.vmem [#allocation4], %s451
          %v453 = vld [vmem:[%s452] sm:$0xff]
          %v454 = vld [vmem:[%s452 + $0x8] sm:$0xff]
          %v455 = vld [vmem:[#allocation2] sm:$0xff]
          %v456 = vld [vmem:[#allocation2 + $0x8] sm:$0xff]
          %458 = vset.pattern.permute.xlu0 0
          %459 = vperm.xlu0 %458, %v455
          %v460 = vpop.permute.xlu0 %459
          %463 = vset.pattern.permute.xlu0 0
          %464 = vperm.xlu0 %463, %v456
          %v465 = vpop.permute.xlu0 %464
          %v467 = vsub.f32 %v453, %v460
          %v468 = vsub.f32 %v454, %v465
          %469 = vst [vmem:[%s257] sm:$0xff] %v467
          %470 = vst [vmem:[%s257 + $0x8] sm:$0xff] %v468
        $region56: #{projection_layer.1} parent=31 // pred_fallthru
          _
        %s471 = sand.u32 %s135, 1
        %s472 = scalar_lea.sflag [#allocation7], %s471
        %s473 = sand.u32 %s135, 1
        %s474 = smul.addr %s473, 16
        %s475 = scalar_lea.vmem [#allocation10], %s474
        // Predicated region
        $region57: #{projection_layer.1} parent=31 // pred_check
          %p476 = pneg %p145
        $region58: #{projection_layer.1} parent=31 // pred_check_branch
          %478 = sbr.rel (%p476) target = $region60
        $region59: #{projection_layer.1} parent=31 // pred_region
          %s479 = ssub.s32 %s26, 1
          %p480 = scmp.gt.s32.totalorder %s479, 0
          %s481 = scalar_select %p480, %s479, 0
          %s482 = smul.u32 2, %s25
          %s484 = ssub.s32 256, 256
          %485 = vsyncadd %s472, %s484
          %s486 = sadd.s32 %s481, %s482
          %s487 = smul.addr %s486, 128
          %s488 = scalar_lea.hbm %s3, %s487
          %s489 = sshll.u32 %s475, 4
          %s490 = int_to_ptr.vmem [resolvable:$true] %s489
          %495 = dma.vmem_to_hbm [thread:$0]  %s490, 256, %s488, %s472, 128, 128, 8
        $region60: #{projection_layer.1} parent=31 // pred_fallthru
          _
      $region32: #{projection_layer.1} parent=5 // pred_fallthru
        _
      %p496 = scmp.le.s32.totalorder 2, %s16
      // Predicated region
      $region61: #{projection_layer.1} parent=5 // pred_check
        %p497 = pneg %p496
      $region62: #{projection_layer.1} parent=5 // pred_check_branch
        %499 = sbr.rel (%p497) target = $region64
      $region63: #{projection_layer.1} parent=5 // pred_region
        %s500 = ssub.s32 %s16, 2
        // Predicated region
        $region65: #{projection_layer.1} parent=63 // pred_check
          %p501 = pneg %p151
        $region66: #{projection_layer.1} parent=63 // pred_check_branch
          %503 = sbr.rel (%p501) target = $region68
        $region67: #{projection_layer.1} parent=63 // pred_region
          %s504 = sand.u32 %s136, 1
          %s505 = scalar_lea.sflag [#allocation7], %s504
          %s506 = sand.u32 %s136, 1
          %s507 = smul.addr %s506, 16
          %s508 = scalar_lea.vmem [#allocation10], %s507
          %509 = dma.done %s505, 256
        $region68: #{projection_layer.1} parent=63 // pred_fallthru
          _
      $region64: #{projection_layer.1} parent=5 // pred_fallthru
        _
    $region6: #{projection_layer.1} parent=1 // loop_footer
      %s20 = sadd.s32 1, %s16
    $region7: #{projection_layer.1} parent=1 // loop_footer_branch
      %15 = sbr.rel target = $region3
    $region8: #{projection_layer.1} parent=1 // loop_exit
      _
    %510 = vsyncpa [#allocation6], 1
    %s511 = scalar_lea.sflag [#allocation6], 1
    %512 = vsyncpa %s511, 1
    %513 = vsyncpa [#allocation9], 1
    %s514 = scalar_lea.sflag [#allocation9], 1
    %515 = vsyncpa %s514, 1
    %516 = vsyncpa [#allocation7], 1
    %s517 = scalar_lea.sflag [#allocation7], 1
    %518 = vsyncpa %s517, 1

</llo_original>
